<compile_context>
chip_gen: v6e
topology: v6e:2x2x1
jax: 0.10.0
libtpu: 0.0.40
codegen_flags: <defaults>
</compile_context>

<pallas_src>
import jax
import jax.numpy as jnp
from jax.experimental import pallas as pl
from jax.experimental.pallas import tpu as pltpu


def spatial_attention_kernel(x_ref, w_ref, o_ref):
    # x_ref: (Bblk, N, F*T)
    # w_ref: (F*T, 2T)   = concat([W1*W2 fused, W3 on the diagonal of T], axis=1)
    # o_ref: (Bblk, N, N)
    xb = x_ref[...]                                   # (Bblk, N, FT)
    bblk, n, ft = xb.shape
    t2 = w_ref.shape[1]
    t = t2 // 2

    # Single tall MXU matmul for both projections.
    x2d = xb.reshape(bblk * n, ft)                    # (Bblk*N, FT)
    proj = jnp.dot(x2d, w_ref[...],
                   preferred_element_type=jnp.float32)  # (Bblk*N, 2T) f32
    proj = proj.reshape(bblk, n, t2)

    # lhs[b, n, t'] = sum_{f,t} x[b,n,f,t] * W1[t] * W2[f,t']
    # rhs_t[b, n, t'] = sum_f  W3[f] * x[b,n,f,t']
    lhs = proj[:, :, :t].astype(xb.dtype)             # (Bblk, N, T)
    rhs_t = proj[:, :, t:].astype(xb.dtype)           # (Bblk, N, T)

    # product[b, i, j] = sum_t lhs[b,i,t] * rhs_t[b,j,t]
    product = jnp.einsum('bit,bjt->bij', lhs, rhs_t,
                         preferred_element_type=jnp.float32)  # (Bblk, N, N)

    # softmax over axis 1 (rows i) == torch.softmax(product, dim=1) for (B,N,N)
    m = jnp.max(product, axis=1, keepdims=True)
    e = jnp.exp(product - m)
    s = jnp.sum(e, axis=1, keepdims=True)
    o_ref[...] = (e * pl.reciprocal(s, approx=False)).astype(o_ref.dtype)


def _vmem_capacity_bytes(default=64 * 1024 * 1024):
    """Physical VMEM (128 MiB v5e/v6e, 64 MiB per-TC v7x); conservative fallback."""
    try:
        return int(pltpu.get_tpu_info().vmem_capacity_bytes)
    except Exception:
        return default


def _pick_block_b(B, N, FT, T, itemsize, vmem_budget_bytes, min_grid):
    """Largest batch block that fits the VMEM budget and keeps >= min_grid steps."""
    f32 = 4
    # Per-batch live VMEM (bytes):
    #   input block (double-buffered):     2 * N*FT * itemsize
    #   output block (double-buffered):    2 * N*N  * itemsize
    #   f32 intermediates:  proj (N*2T) + lhs/rhs_t copies (2*N*T)
    #                       + product & exp (~2*N*N)
    per_batch = (2 * N * FT * itemsize
                 + 2 * N * N * itemsize
                 + (N * 2 * T + 2 * N * T) * f32
                 + 2 * N * N * f32)
    cap = max(1, vmem_budget_bytes // max(per_batch, 1))
    # Keep >= min_grid steps: amortizes pipeline overhead while leaving >= 2
    # steps per TensorCore after the v7x megacore split.
    block_b = max(1, min(int(cap), pl.cdiv(B, min_grid), B))
    return block_b


def spatial_attention(x, W1, W2, W3, *, block_b=None,
                      vmem_budget_bytes=None, vmem_limit_bytes=None):
    """x: (B, N, F_in, T); W1: (T,); W2: (F_in, T); W3: (F_in,). Returns (B, N, N)."""
    B, N, F, T = x.shape
    FT = F * T

    # Contiguous fold (no data movement): lane axis becomes F*T.
    x_flat = x.reshape(B, N, FT)

    # Fused weights (tiny, computed once in the wrapper):
    #   W12[f*T+t, t'] = W1[t] * W2[f, t']
    #   W3M[f*T+t, t'] = W3[f] * delta(t, t')
    w12 = (W1[None, :, None] * W2[:, None, :]).reshape(FT, T)
    w3m = (W3[:, None, None] * jnp.eye(T, dtype=W3.dtype)[None, :, :]).reshape(FT, T)
    w_cat = jnp.concatenate([w12, w3m], axis=1).astype(x.dtype)   # (FT, 2T)

    capacity = _vmem_capacity_bytes()
    if vmem_budget_bytes is None:
        # ~24 MiB on 128 MiB chips (v5e/v6e), ~16 MiB on 64 MiB chips (v7x).
        vmem_budget_bytes = min(capacity // 4, 24 * 1024 * 1024)
    if vmem_limit_bytes is None:
        # ~96 MiB on v5e/v6e, ~48 MiB on v7x.
        vmem_limit_bytes = min(capacity * 3 // 4, 96 * 1024 * 1024)

    if block_b is None:
        block_b = _pick_block_b(B, N, FT, T, jnp.dtype(x.dtype).itemsize,
                                vmem_budget_bytes, min_grid=4)
    block_b = max(1, min(block_b, B))

    # cdiv grid: pad the tail batches (softmax of zeros is uniform -> finite),
    # slice them off afterwards.  No silent truncation for any B / block_b.
    grid_b = pl.cdiv(B, block_b)
    B_pad = grid_b * block_b
    if B_pad != B:
        x_flat = jnp.pad(x_flat, ((0, B_pad - B), (0, 0), (0, 0)))

    out = pl.pallas_call(
        spatial_attention_kernel,
        out_shape=jax.ShapeDtypeStruct((B_pad, N, N), x.dtype),
        grid_spec=pltpu.PrefetchScalarGridSpec(
            num_scalar_prefetch=0,
            grid=(grid_b,),
            in_specs=[
                pl.BlockSpec((block_b, N, FT), lambda b: (b, 0, 0)),
                pl.BlockSpec((FT, 2 * T), lambda b: (0, 0)),
            ],
            out_specs=pl.BlockSpec((block_b, N, N), lambda b: (b, 0, 0)),
        ),
        compiler_params=pltpu.CompilerParams(
            dimension_semantics=("parallel",),
            vmem_limit_bytes=int(vmem_limit_bytes),
        ),
    )(x_flat, w_cat)

    if B_pad != B:
        out = out[:B]
    return out


def spatial_attention_ref(x, W1, W2, W3):
    """Pure-JAX reference mirroring the PyTorch forward."""
    lhs = jnp.matmul(jnp.matmul(x, W1), W2)          # (B, N, T)
    rhs = jnp.einsum('f,bnft->btn', W3, x)           # (B, T, N)
    product = jnp.matmul(lhs, rhs)                   # (B, N, N)
    return jax.nn.softmax(product, axis=1)


if __name__ == "__main__":
    key = jax.random.PRNGKey(0)

    # Shapes implied by the module: x is (batch, N, F_in, T).
    B, N, F_in, T = 2, 16, 4, 8
    kx, k1, k2, k3 = jax.random.split(key, 4)
    x = jax.random.normal(kx, (B, N, F_in, T), dtype=jnp.float32)
    W1 = jax.random.normal(k1, (T,), dtype=jnp.float32)
    W2 = jax.random.normal(k2, (F_in, T), dtype=jnp.float32)
    W3 = jax.random.normal(k3, (F_in,), dtype=jnp.float32)

    out = spatial_attention(x, W1, W2, W3)
    out = jax.block_until_ready(out)
    ref = spatial_attention_ref(x, W1, W2, W3)
    assert out.shape == (B, N, N)
    assert jnp.allclose(out, ref, atol=1e-4, rtol=1e-4), "mismatch vs reference"

    # Odd batch count exercises the cdiv / tail-padding path.
    B2 = 3
    kx2 = jax.random.fold_in(kx, 1)
    x2 = jax.random.normal(kx2, (B2, N, F_in, T), dtype=jnp.float32)
    out2 = jax.block_until_ready(spatial_attention(x2, W1, W2, W3, block_b=2))
    ref2 = spatial_attention_ref(x2, W1, W2, W3)
    assert out2.shape == (B2, N, N)
    assert jnp.allclose(out2, ref2, atol=1e-4, rtol=1e-4), "mismatch vs reference (tail)"

    print("KERNEL_OK")
</pallas_src>

<mosaic_0001>
module attributes {stable_mosaic.version = 11 : i64} {
  func.func @spatial_attention_kernel(%arg0: i32, %arg1: memref<1x16x32xf32, #tpu.memory_space<vmem>>, %arg2: memref<32x16xf32, #tpu.memory_space<vmem>>, %arg3: memref<1x16x16xf32, #tpu.memory_space<vmem>>) attributes {dimension_semantics = [#tpu.dimension_semantics<parallel>], iteration_bounds = array<i64: 2>, scalar_prefetch = 0 : i64, scratch_operands = 0 : i64, tpu.core_type = #tpu.core_type<tc>, window_params = [{transform_indices = @transform_0, window_bounds = array<i64: 1, 16, 32>}, {pipeline_mode = #tpu.pipeline_mode<synchronous>, transform_indices = @transform_1, window_bounds = array<i64: 32, 16>}, {transform_indices = @transform_2, window_bounds = array<i64: 1, 16, 16>}]} {
    %c0 = arith.constant 0 : index
    %c0_0 = arith.constant 0 : index
    %c0_1 = arith.constant 0 : index
    %0 = vector.load %arg1[%c0, %c0_0, %c0_1] : memref<1x16x32xf32, #tpu.memory_space<vmem>>, vector<1x16x32xf32>
    %1 = vector.shape_cast %0 : vector<1x16x32xf32> to vector<16x32xf32>
    %c0_2 = arith.constant 0 : index
    %c0_3 = arith.constant 0 : index
    %2 = vector.load %arg2[%c0_2, %c0_3] : memref<32x16xf32, #tpu.memory_space<vmem>>, vector<32x16xf32>
    %cst = arith.constant dense<0.000000e+00> : vector<16x16xf32>
    %3 = tpu.matmul %1, %2, %cst {dimension_numbers = #tpu.dot_dimension_numbers<[1], [0], [0], [1], [0, 0, 1, 1], [], []>} : vector<16x32xf32>, vector<32x16xf32>, vector<16x16xf32> -> vector<16x16xf32>
    %4 = vector.shape_cast %3 : vector<16x16xf32> to vector<1x16x16xf32>
    %5 = vector.extract_strided_slice %4 {offsets = [0, 0, 0], sizes = [1, 16, 8], strides = [1, 1, 1]} : vector<1x16x16xf32> to vector<1x16x8xf32>
    %6 = vector.extract_strided_slice %4 {offsets = [0, 0, 8], sizes = [1, 16, 8], strides = [1, 1, 1]} : vector<1x16x16xf32> to vector<1x16x8xf32>
    "tpu.trace_start"() <{level = 10 : i32, message = "bit,bjt->bij"}> : () -> ()
    %cst_4 = arith.constant dense<0.000000e+00> : vector<1x16x16xf32>
    %7 = tpu.matmul %5, %6, %cst_4 {dimension_numbers = #tpu.dot_dimension_numbers<[2], [2], [1], [1], [0, 0, 0, 1, 1, 1], [0], [0]>} : vector<1x16x8xf32>, vector<1x16x8xf32>, vector<1x16x16xf32> -> vector<1x16x16xf32>
    "tpu.trace_stop"() : () -> ()
    %cst_5 = arith.constant dense<0xFF800000> : vector<1x16xf32>
    %8 = vector.multi_reduction <maximumf>, %7, %cst_5 [1] : vector<1x16x16xf32> to vector<1x16xf32>
    %9 = vector.shape_cast %8 : vector<1x16xf32> to vector<1x1x16xf32>
    %10 = vector.broadcast %9 : vector<1x1x16xf32> to vector<1x16x16xf32>
    %11 = arith.subf %7, %10 : vector<1x16x16xf32>
    %12 = math.exp %11 : vector<1x16x16xf32>
    %cst_6 = arith.constant dense<0.000000e+00> : vector<1x16xf32>
    %13 = vector.multi_reduction <add>, %12, %cst_6 [1] : vector<1x16x16xf32> to vector<1x16xf32>
    %14 = vector.shape_cast %13 : vector<1x16xf32> to vector<1x1x16xf32>
    %15 = tpu.reciprocal %14 : vector<1x1x16xf32> -> vector<1x1x16xf32>
    %16 = vector.broadcast %15 : vector<1x1x16xf32> to vector<1x16x16xf32>
    %17 = arith.mulf %12, %16 : vector<1x16x16xf32>
    %c0_7 = arith.constant 0 : index
    %c0_8 = arith.constant 0 : index
    %c0_9 = arith.constant 0 : index
    %18 = vector.load %arg3[%c0_7, %c0_8, %c0_9] : memref<1x16x16xf32, #tpu.memory_space<vmem>>, vector<1x16x16xf32>
    tpu.vector_store %arg3[%c0_7, %c0_8, %c0_9], %17 {strides = array<i32>} : memref<1x16x16xf32, #tpu.memory_space<vmem>>, vector<1x16x16xf32>,
    return
  }
  func.func @transform_0(%arg0: i32) -> (i32, i32, i32) {
    %c0_i32 = arith.constant 0 : i32
    %c0_i32_0 = arith.constant 0 : i32
    %c0_i32_1 = arith.constant 0 : i32
    return %arg0, %c0_i32, %c0_i32_0 : i32, i32, i32
  }
  func.func @transform_1(%arg0: i32) -> (i32, i32) {
    %c0_i32 = arith.constant 0 : i32
    %c0_i32_0 = arith.constant 0 : i32
    %c0_i32_1 = arith.constant 0 : i32
    return %c0_i32, %c0_i32_0 : i32, i32
  }
  func.func @transform_2(%arg0: i32) -> (i32, i32, i32) {
    %c0_i32 = arith.constant 0 : i32
    %c0_i32_0 = arith.constant 0 : i32
    %c0_i32_1 = arith.constant 0 : i32
    return %arg0, %c0_i32, %c0_i32_0 : i32, i32, i32
  }
}

</mosaic_0001>

<llo_original>
// kernel: tpu_custom_call.1
$region0: #{tpu_custom_call.1}
  #allocation0 [shape = 'u32[]', space=smem, size = 0x4, offset = 0x4, fixed_abs, tag = 'smem constant byte address 0x4 - core index']
  #allocation1 [shape = 'u32[144,128]{1,0:T(1,128)}', space=vmem, size = 0x12000, scoped, tag = 'internal scratch']
  %s0 = inlined_call_operand.vmem [shape: f32[2,16,32], index: 0, kind: input, shape index: {}]
  %s1 = inlined_call_operand.vmem [shape: f32[32,16], index: 1, kind: input, shape index: {}]
  %s2 = inlined_call_operand.hbm [shape: f32[2,16,16], index: 2, kind: output, shape index: {}]
  %s3 = sld [smem:[#allocation0]]
  $region41: #{tpu_custom_call.1} parent=0
    _
  %s5 = ssub.s32 1, %s3
  %s6 = scalar_select 0, %s5, %s3
  $region1: #{tpu_custom_call.1} parent=0
    #allocation2 [shape = 'u8[16384]{0}', space=vmem, size = 0x4000, scoped, tag = 'output window, operand 0']
    #allocation3 [shape = 's32[2]{0}', space=sflag, size = 0x8, scoped, tag = 'scoped memory for tpu_custom_call.1']
    %7 = vsyncpa [#allocation3], 0
    %s8 = scalar_lea.sflag [#allocation3], 1
    %9 = vsyncpa %s8, 0
    loop: start=0, step=1, limit=4
    $region2: #{tpu_custom_call.1} parent=1 // loop_pre_header
      _
    $region3: #{tpu_custom_call.1} parent=1 // loop_header
      %s11 = sphi 0, %s15
      %p12 = scmp.ge.s32.totalorder %s11, 4
      %s21 = sphi 0, %s23
      %s24 = sphi 0, %s21
      %s25 = sphi 0, %s24
      %s41 = sphi 0, %s25
      %s45 = sphi 0, %s45
      %s47 = sphi 0, %s45
      %s48 = sphi 0, %s47
      %s62 = sphi 0, %s48
      %s68 = sphi 0, %s70
      %s71 = sphi 0, %s68
      %s72 = sphi 0, %s71
      %s88 = sphi 0, %s72
    $region4: #{tpu_custom_call.1} parent=1 // loop_header_branch
      %14 = sbr.rel (%p12) target = $region8
    $region5: #{tpu_custom_call.1} parent=1 // loop_body
      %s16 = ssub.s32 %s11, 1
      %s17 = ssub.s32 %s11, 2
      %s18 = sadd.s32 %s11, 1
      %s19 = ssub.s32 %s11, %s18
      %p20 = scmp.eq.s32.totalorder %s19, 0
      %s22 = sadd.s32 %s21, 1
      %s23 = scalar_select %p20, %s21, %s22
      %p26 = pneg %p20
      %p27 = scmp.eq.s32.totalorder %s11, 1
      %p28 = por %p26, %p27
      %p29 = scmp.ne.s32.totalorder %s21, %s24
      %p30 = scmp.eq.s32.totalorder %s11, 0
      %p31 = por %p29, %p30
      %p32 = scmp.ne.s32.totalorder %s21, %s24
      %p33 = scmp.eq.s32.totalorder %s16, 1
      %p34 = por %p32, %p33
      %p35 = scmp.ne.s32.totalorder %s24, %s25
      %p36 = scmp.eq.s32.totalorder %s16, 0
      %p37 = por %p35, %p36
      %p38 = scmp.ne.s32.totalorder %s24, %s25
      %p39 = scmp.eq.s32.totalorder %s17, 1
      %p40 = por %p38, %p39
      %p42 = scmp.ne.s32.totalorder %s25, %s41
      %p43 = scmp.eq.s32.totalorder %s17, 0
      %p44 = por %p42, %p43
      %s46 = sadd.s32 %s45, 1
      %p49 = scmp.eq.s32.totalorder %s11, 1
      %p50 = scmp.ne.s32.totalorder %s45, %s47
      %p51 = scmp.eq.s32.totalorder %s11, 0
      %p52 = por %p50, %p51
      %p53 = scmp.ne.s32.totalorder %s45, %s47
      %p54 = scmp.eq.s32.totalorder %s16, 1
      %p55 = por %p53, %p54
      %p56 = scmp.ne.s32.totalorder %s47, %s48
      %p57 = scmp.eq.s32.totalorder %s16, 0
      %p58 = por %p56, %p57
      %p59 = scmp.ne.s32.totalorder %s47, %s48
      %p60 = scmp.eq.s32.totalorder %s17, 1
      %p61 = por %p59, %p60
      %p63 = scmp.ne.s32.totalorder %s48, %s62
      %p64 = scmp.eq.s32.totalorder %s17, 0
      %p65 = por %p63, %p64
      %s66 = ssub.s32 %s11, %s18
      %p67 = scmp.eq.s32.totalorder %s66, 0
      %s69 = sadd.s32 %s68, 1
      %s70 = scalar_select %p67, %s68, %s69
      %p73 = pneg %p67
      %p74 = scmp.eq.s32.totalorder %s11, 1
      %p75 = por %p73, %p74
      %p76 = scmp.ne.s32.totalorder %s68, %s71
      %p77 = scmp.eq.s32.totalorder %s11, 0
      %p78 = por %p76, %p77
      %p79 = scmp.ne.s32.totalorder %s68, %s71
      %p80 = scmp.eq.s32.totalorder %s16, 1
      %p81 = por %p79, %p80
      %p82 = scmp.ne.s32.totalorder %s71, %s72
      %p83 = scmp.eq.s32.totalorder %s16, 0
      %p84 = por %p82, %p83
      %p85 = scmp.ne.s32.totalorder %s71, %s72
      %p86 = scmp.eq.s32.totalorder %s17, 1
      %p87 = por %p85, %p86
      %p89 = scmp.ne.s32.totalorder %s72, %s88
      %p90 = scmp.eq.s32.totalorder %s17, 0
      %p91 = por %p89, %p90
      %p92 = scmp.le.s32.totalorder 1, %s11
      %p93 = scmp.lt.s32.totalorder %s11, 3
      %p94 = pnand %p92, %p93
      %p95 = pneg %p94
      // Predicated region
      $region9: #{tpu_custom_call.1} parent=5 // pred_check
        _
      $region10: #{tpu_custom_call.1} parent=5 // pred_check_branch
        %97 = sbr.rel (%p94) target = $region12
      $region11: #{tpu_custom_call.1} parent=5 // pred_region
        %s98 = ssub.s32 %s11, 1
        // Predicated region
        $region13: #{tpu_custom_call.1} parent=11 // pred_check
          %p99 = pneg %p58
        $region14: #{tpu_custom_call.1} parent=11 // pred_check_branch
          %101 = sbr.rel (%p99) target = $region16
        $region15: #{tpu_custom_call.1} parent=11 // pred_region
          _
        $region16: #{tpu_custom_call.1} parent=11 // pred_fallthru
          _
      $region12: #{tpu_custom_call.1} parent=5 // pred_fallthru
        _
      %p102 = scmp.lt.s32.totalorder %s11, 2
      // Predicated region
      $region17: #{tpu_custom_call.1} parent=5 // pred_check
        %p103 = pneg %p102
      $region18: #{tpu_custom_call.1} parent=5 // pred_check_branch
        %105 = sbr.rel (%p103) target = $region20
      $region19: #{tpu_custom_call.1} parent=5 // pred_region
        // Predicated region
        $region21: #{tpu_custom_call.1} parent=19 // pred_check
          %p106 = pneg %p31
        $region22: #{tpu_custom_call.1} parent=19 // pred_check_branch
          %108 = sbr.rel (%p106) target = $region24
        $region23: #{tpu_custom_call.1} parent=19 // pred_region
          %p109 = scmp.lt.s32.totalorder %s11, 1
          %s110 = scalar_select %p109, %s11, 1
          %s111 = smul.addr %s110, 2
          %s112 = smul.addr %s111, 8
          %s113 = scalar_lea.vmem %s0, %s112
        $region24: #{tpu_custom_call.1} parent=19 // pred_fallthru
          _
      $region20: #{tpu_custom_call.1} parent=5 // pred_fallthru
        _
      %p114 = scmp.le.s32.totalorder 1, %s11
      %p115 = scmp.lt.s32.totalorder %s11, 3
      %p116 = pnand %p114, %p115
      %p117 = pneg %p116
      // Predicated region
      $region25: #{tpu_custom_call.1} parent=5 // pred_check
        _
      $region26: #{tpu_custom_call.1} parent=5 // pred_check_branch
        %119 = sbr.rel (%p116) target = $region28
      $region27: #{tpu_custom_call.1} parent=5 // pred_region
        %s120 = ssub.s32 %s11, 1
        %p121 = scmp.lt.s32.totalorder %s16, 1
        %s122 = scalar_select %p121, %s16, 1
        %s123 = smul.addr %s122, 2
        %s124 = smul.addr %s123, 8
        %s125 = scalar_lea.vmem %s0, %s124
        %p126 = pneg %p37
        %p127 = pneg %p34
        %p128 = pneg %p58
        %p129 = pneg %p55
        %p130 = pneg %p84
        %p131 = pneg %p81
        %s132 = sand.u32 %s71, 1
        %s133 = scalar_lea.sflag [#allocation3], %s132
        %s134 = sand.u32 %s71, 1
        %s135 = smul.addr %s134, 16
        %s136 = scalar_lea.vmem [#allocation2], %s135
        %p137 = scmp.lt.s32.totalorder %s16, 1
        %s138 = scalar_select %p137, %s16, 1
        %s139 = smul.addr %s138, 2
        %s140 = smul.addr %s139, 8
        %s141 = scalar_lea.vmem %s0, %s140
        %v142 = vld [vmem:[%s141] sm:$0xff]
        %v143 = vld [vmem:[%s141 + $0x8] sm:$0xff]
        %v144 = vld [vmem:[%s1] sm:$0xff]
        %v145 = vld [vmem:[%s1 + $0x8] sm:$0xff]
        %v146 = vld [vmem:[%s1 + $0x10] sm:$0xff]
        %v147 = vld [vmem:[%s1 + $0x18] sm:$0xff]
        %vm148 = vcmask 261120
        %v150 = vsel %vm148, %v142, 0
        %v153 = vsel %vm148, %v143, 0
        %155 = vmatprep.subr.mxu0 0.0
        %156 = vmatpush1.msra.mxu0 0.0
        %157 = vmatprep.subr.mxu0 0.0
        %158 = vmatpush1.msra.mxu0 0.0
        %159 = vmatprep.subr.mxu0 0.0
        %160 = vmatpush1.msra.mxu0 0.0
        %161 = vmatprep.subr.mxu0 0.0
        %162 = vmatpush1.msra.mxu0 0.0
        %163 = vmatprep.subr.mxu0 0.0
        %164 = vmatpush1.msra.mxu0 0.0
        %165 = vmatprep.subr.mxu0 0.0
        %166 = vmatpush1.msra.mxu0 0.0
        %167 = vmatprep.subr.mxu0 0.0
        %168 = vmatpush1.msra.mxu0 0.0
        %169 = vmatprep.subr.mxu0 0.0
        %170 = vmatpush1.msra.mxu0 0.0
        %171 = vmatprep.subr.mxu0 0.0
        %172 = vmatpush1.msra.mxu0 0.0
        %173 = vmatprep.subr.mxu0 0.0
        %174 = vmatpush1.msra.mxu0 0.0
        %175 = vmatprep.subr.mxu0 0.0
        %176 = vmatpush1.msra.mxu0 0.0
        %177 = vmatprep.subr.mxu0 0.0
        %178 = vmatpush1.msra.mxu0 0.0
        %179 = vmatprep.subr.mxu0 0.0
        %180 = vmatpush1.msra.mxu0 %v147
        %181 = vmatprep.subr.mxu0 0.0
        %182 = vmatpush1.msra.mxu0 %v146
        %183 = vmatprep.subr.mxu0 0.0
        %184 = vmatpush1.msra.mxu0 %v145
        %185 = vmatprep.subr.mxu0 0.0
        %186 = vmatpush1.msra.mxu0 %v144
        %187 = vmatprep.subr.mxu0 0.0
        %188 = vmatpush2.msra.mxu0 0.0
        %189 = vmatprep.subr.mxu0 0.0
        %190 = vmatpush2.msra.mxu0 0.0
        %191 = vmatprep.subr.mxu0 0.0
        %192 = vmatpush2.msra.mxu0 0.0
        %193 = vmatprep.subr.mxu0 0.0
        %194 = vmatpush2.msra.mxu0 0.0
        %195 = vmatprep.subr.mxu0 0.0
        %196 = vmatpush2.msra.mxu0 0.0
        %197 = vmatprep.subr.mxu0 0.0
        %198 = vmatpush2.msra.mxu0 0.0
        %199 = vmatprep.subr.mxu0 0.0
        %200 = vmatpush2.msra.mxu0 0.0
        %201 = vmatprep.subr.mxu0 0.0
        %202 = vmatpush2.msra.mxu0 0.0
        %203 = vmatprep.subr.mxu0 0.0
        %204 = vmatpush2.msra.mxu0 0.0
        %205 = vmatprep.subr.mxu0 0.0
        %206 = vmatpush2.msra.mxu0 0.0
        %207 = vmatprep.subr.mxu0 0.0
        %208 = vmatpush2.msra.mxu0 0.0
        %209 = vmatprep.subr.mxu0 0.0
        %210 = vmatpush2.msra.mxu0 0.0
        %211 = vmatprep.subr.mxu0 0.0
        %212 = vmatpush2.msra.mxu0 0.0
        %213 = vmatprep.subr.mxu0 0.0
        %214 = vmatpush2.msra.mxu0 0.0
        %215 = vmatprep.subr.mxu0 0.0
        %216 = vmatpush2.msra.mxu0 0.0
        %217 = vmatprep.subr.mxu0 0.0
        %218 = vmatpush2.msra.mxu0 0.0
        %219 = vmatprep.mubr.f32.mxu0 0.0
        %220 = vmatmul.mubr.f32.gmra.mxu0 %v150
        %v221 = vpop.f32.mrf.mxu0
        %v222 = vadd.f32 0.0, %v221
        %v223 = vpop.f32.mrf.mxu0
        %224 = vmatprep.mubr.f32.mxu0 0.0
        %225 = vmatmul.mubr.f32.gmra.mxu0 %v153
        %v226 = vpop.f32.mrf.mxu0
        %v227 = vadd.f32 0.0, %v226
        %v228 = vpop.f32.mrf.mxu0
        %229 = vdwg.mxu0
        %232 = vrot.lane.b32.xlu0 %v222, 120
        %v233 = vpop.permute.xlu0 %232
        %234 = vrot.lane.b32.xlu0 %v227, 120
        %v235 = vpop.permute.xlu0 %234
        %vm236 = vcmask 64512
        %v237 = vsel %vm236, %v222, 0
        %v239 = vsel %vm236, %v227, 0
        %v241 = vsel %vm236, %v233, 0
        %v243 = vsel %vm236, %v235, 0
        %245 = vmatprep.subr.mxu0 0.0
        %246 = vmatpush1.xpose.msra.mxu0 0.0
        %247 = vmatprep.subr.mxu0 0.0
        %248 = vmatpush1.xpose.msra.mxu0 0.0
        %249 = vmatprep.subr.mxu0 0.0
        %250 = vmatpush1.xpose.msra.mxu0 0.0
        %251 = vmatprep.subr.mxu0 0.0
        %252 = vmatpush1.xpose.msra.mxu0 0.0
        %253 = vmatprep.subr.mxu0 0.0
        %254 = vmatpush1.xpose.msra.mxu0 0.0
        %255 = vmatprep.subr.mxu0 0.0
        %256 = vmatpush1.xpose.msra.mxu0 0.0
        %257 = vmatprep.subr.mxu0 0.0
        %258 = vmatpush1.xpose.msra.mxu0 0.0
        %259 = vmatprep.subr.mxu0 0.0
        %260 = vmatpush1.xpose.msra.mxu0 0.0
        %261 = vmatprep.subr.mxu0 0.0
        %262 = vmatpush1.xpose.msra.mxu0 0.0
        %263 = vmatprep.subr.mxu0 0.0
        %264 = vmatpush1.xpose.msra.mxu0 0.0
        %265 = vmatprep.subr.mxu0 0.0
        %266 = vmatpush1.xpose.msra.mxu0 0.0
        %267 = vmatprep.subr.mxu0 0.0
        %268 = vmatpush1.xpose.msra.mxu0 0.0
        %269 = vmatprep.subr.mxu0 0.0
        %270 = vmatpush1.xpose.msra.mxu0 0.0
        %271 = vmatprep.subr.mxu0 0.0
        %272 = vmatpush1.xpose.msra.mxu0 0.0
        %273 = vmatprep.subr.mxu0 0.0
        %274 = vmatpush1.xpose.msra.mxu0 %v243
        %275 = vmatprep.subr.mxu0 0.0
        %276 = vmatpush1.xpose.msra.mxu0 %v241
        %277 = vmatprep.subr.mxu0 0.0
        %278 = vmatpush2.xpose.msra.mxu0 0.0
        %279 = vmatprep.subr.mxu0 0.0
        %280 = vmatpush2.xpose.msra.mxu0 0.0
        %281 = vmatprep.subr.mxu0 0.0
        %282 = vmatpush2.xpose.msra.mxu0 0.0
        %283 = vmatprep.subr.mxu0 0.0
        %284 = vmatpush2.xpose.msra.mxu0 0.0
        %285 = vmatprep.subr.mxu0 0.0
        %286 = vmatpush2.xpose.msra.mxu0 0.0
        %287 = vmatprep.subr.mxu0 0.0
        %288 = vmatpush2.xpose.msra.mxu0 0.0
        %289 = vmatprep.subr.mxu0 0.0
        %290 = vmatpush2.xpose.msra.mxu0 0.0
        %291 = vmatprep.subr.mxu0 0.0
        %292 = vmatpush2.xpose.msra.mxu0 0.0
        %293 = vmatprep.subr.mxu0 0.0
        %294 = vmatpush2.xpose.msra.mxu0 0.0
        %295 = vmatprep.subr.mxu0 0.0
        %296 = vmatpush2.xpose.msra.mxu0 0.0
        %297 = vmatprep.subr.mxu0 0.0
        %298 = vmatpush2.xpose.msra.mxu0 0.0
        %299 = vmatprep.subr.mxu0 0.0
        %300 = vmatpush2.xpose.msra.mxu0 0.0
        %301 = vmatprep.subr.mxu0 0.0
        %302 = vmatpush2.xpose.msra.mxu0 0.0
        %303 = vmatprep.subr.mxu0 0.0
        %304 = vmatpush2.xpose.msra.mxu0 0.0
        %305 = vmatprep.subr.mxu0 0.0
        %306 = vmatpush2.xpose.msra.mxu0 0.0
        %307 = vmatprep.subr.mxu0 0.0
        %308 = vmatpush2.xpose.msra.mxu0 0.0
        %309 = vmatprep.mubr.f32.mxu0 0.0
        %310 = vmatmul.mubr.f32.gmra.mxu0 %v237
        %v311 = vpop.f32.mrf.mxu0
        %v312 = vadd.f32 0.0, %v311
        %v313 = vpop.f32.mrf.mxu0
        %314 = vmatprep.mubr.f32.mxu0 0.0
        %315 = vmatmul.mubr.f32.gmra.mxu0 %v239
        %v316 = vpop.f32.mrf.mxu0
        %v317 = vadd.f32 0.0, %v316
        %v318 = vpop.f32.mrf.mxu0
        %319 = vdwg.mxu0
        %vm320 = vcmask 130048
        %v321 = vsel %vm320, %v312, -inf
        %v322 = vsel %vm320, %v317, -inf
        %v323 = vmax.f32 %v321, %v322
        %v324 = vrot.slane %v323, 4
        %v325 = vmax.f32 %v323, %v324
        %v326 = vrot.slane %v325, 2
        %v327 = vmax.f32 %v325, %v326
        %v328 = vrot.slane %v327, 1
        %v329 = vmax.f32 %v327, %v328
        %v330 = vsub.f32 %v312, %v329
        %v331 = vsub.f32 %v317, %v329
        %v332 = vmul.f32 %v330, 1.442695
        %v333 = vpow.pop %v332
        %v334 = vmul.f32 %v331, 1.442695
        %v335 = vpow.pop %v334
        %v336 = vsel %vm320, %v333, 0.0
        %v337 = vsel %vm320, %v335, 0.0
        %v338 = vadd.f32 %v336, %v337
        %v339 = vrot.slane %v338, 4
        %v340 = vadd.f32 %v338, %v339
        %v341 = vrot.slane %v340, 2
        %v342 = vadd.f32 %v340, %v341
        %v343 = vrot.slane %v342, 1
        %v344 = vadd.f32 %v342, %v343
        %v345 = vrcp.pop %v344
        %v346 = vmul.f32 %v333, %v345
        %v347 = vmul.f32 %v335, %v345
        %348 = vst.msk [vmem:[%s136] sm:$0xff] %vm320, %v346
        %349 = vst.msk [vmem:[%s136 + $0x8] sm:$0xff] %vm320, %v347
        %s350 = sand.u32 %s71, 1
        %s351 = scalar_lea.sflag [#allocation3], %s350
        %s352 = sand.u32 %s71, 1
        %s353 = smul.addr %s352, 16
        %s354 = scalar_lea.vmem [#allocation2], %s353
        // Predicated region
        $region29: #{tpu_custom_call.1} parent=27 // pred_check
          %p355 = pneg %p81
        $region30: #{tpu_custom_call.1} parent=27 // pred_check_branch
          %357 = sbr.rel (%p355) target = $region32
        $region31: #{tpu_custom_call.1} parent=27 // pred_region
          %s359 = ssub.s32 256, 256
          %360 = vsyncadd %s351, %s359
          %s361 = smul.addr %s16, 2
          %s362 = smul.addr %s361, 128
          %s363 = scalar_lea.hbm %s2, %s362
          %s364 = sshll.u32 %s354, 4
          %s365 = int_to_ptr.vmem [resolvable:$true] %s364
          %370 = dma.vmem_to_hbm [thread:$0]  %s365, 256, %s363, %s351, 128, 128, 8
        $region32: #{tpu_custom_call.1} parent=27 // pred_fallthru
          _
      $region28: #{tpu_custom_call.1} parent=5 // pred_fallthru
        _
      %p371 = scmp.le.s32.totalorder 2, %s11
      // Predicated region
      $region33: #{tpu_custom_call.1} parent=5 // pred_check
        %p372 = pneg %p371
      $region34: #{tpu_custom_call.1} parent=5 // pred_check_branch
        %374 = sbr.rel (%p372) target = $region36
      $region35: #{tpu_custom_call.1} parent=5 // pred_region
        %s375 = ssub.s32 %s11, 2
        // Predicated region
        $region37: #{tpu_custom_call.1} parent=35 // pred_check
          %p376 = pneg %p87
        $region38: #{tpu_custom_call.1} parent=35 // pred_check_branch
          %378 = sbr.rel (%p376) target = $region40
        $region39: #{tpu_custom_call.1} parent=35 // pred_region
          %s379 = sand.u32 %s72, 1
          %s380 = scalar_lea.sflag [#allocation3], %s379
          %s381 = sand.u32 %s72, 1
          %s382 = smul.addr %s381, 16
          %s383 = scalar_lea.vmem [#allocation2], %s382
          %384 = dma.done %s380, 256
        $region40: #{tpu_custom_call.1} parent=35 // pred_fallthru
          _
      $region36: #{tpu_custom_call.1} parent=5 // pred_fallthru
        _
    $region6: #{tpu_custom_call.1} parent=1 // loop_footer
      %s15 = sadd.s32 1, %s11
    $region7: #{tpu_custom_call.1} parent=1 // loop_footer_branch
      %10 = sbr.rel target = $region3
    $region8: #{tpu_custom_call.1} parent=1 // loop_exit
      _
    %385 = vsyncpa [#allocation3], 1
    %s386 = scalar_lea.sflag [#allocation3], 1
    %387 = vsyncpa %s386, 1

</llo_original>
